<compile_context>
chip_gen: v5e
topology: v5e:2x2
jax: 0.10.0
libtpu: 0.0.40
codegen_flags: <defaults>
</compile_context>

<pallas_src>
from functools import partial

import jax
import jax.numpy as jnp
from jax import lax
from jax.experimental import pallas as pl
from jax.experimental.pallas import tpu as pltpu

_LANE_PAD = 128  # lane-aligned spatial halo width for the depthwise scratch


# --------------------------------------------------------------------------
# Fused kernel: one batch element per grid step; everything stays in VMEM.
# --------------------------------------------------------------------------
def _fused_block_kernel(x_ref, w1_ref, b1_ref, w2_ref, b2_ref, wp_ref, bp_ref,
                        o_ref, hpad_ref, *, H, W, ksize):
    HW = H * W
    pad = ksize // 2
    cexp = w1_ref.shape[0]

    x = x_ref[0]  # (cin_padded, H*W): channels on sublanes, spatial on lanes

    # ---- expand: 1x1 conv (BN scale folded into w1) + bias + ReLU  (MXU) ----
    h = jnp.dot(w1_ref[...], x, preferred_element_type=jnp.float32)
    h = jnp.maximum(h + b1_ref[...], 0.0)                       # (cexp, HW)

    # ---- depthwise ksize x ksize, stride 1, 'same' padding  (VPU) ----------
    # Spatial halo in VMEM scratch: dy taps land in the zero halo; dx taps
    # that would wrap across a row are killed by a lane mask on the w coord.
    hpad_ref[:, :_LANE_PAD] = jnp.zeros((cexp, _LANE_PAD), jnp.float32)
    hpad_ref[:, _LANE_PAD + HW:] = jnp.zeros((cexp, _LANE_PAD), jnp.float32)
    hpad_ref[:, _LANE_PAD:_LANE_PAD + HW] = h

    col = lax.broadcasted_iota(jnp.int32, (1, HW), 1) % W       # w coord / lane
    acc = jnp.zeros((cexp, HW), jnp.float32)
    for dy in range(-pad, pad + 1):
        for dx in range(-pad, pad + 1):
            k = (dy + pad) * ksize + (dx + pad)
            start = _LANE_PAD + dy * W + dx
            tap = hpad_ref[:, start:start + HW]                 # (cexp, HW)
            contrib = w2_ref[:, k:k + 1] * tap                  # per-chan weight
            if dx < 0:
                contrib = jnp.where(col >= -dx, contrib, 0.0)
            elif dx > 0:
                contrib = jnp.where(col < W - dx, contrib, 0.0)
            acc = acc + contrib
    hdw = jnp.maximum(acc + b2_ref[...], 0.0)                   # (cexp, HW)

    # ---- project 1x1 + skip 1x1 merged into a single MXU matmul ------------
    z = jnp.concatenate([hdw, x], axis=0)                       # (cexp+cinp, HW)
    out = jnp.dot(wp_ref[...], z, preferred_element_type=jnp.float32)
    out = out + bp_ref[...]
    o_ref[0] = out.astype(o_ref.dtype)                          # (cout, HW)


# --------------------------------------------------------------------------
# Wrapper: NCHW in, NCHW out.  Only free reshapes / a tiny channel pad in XLA.
# --------------------------------------------------------------------------
def block_forward(x_nchw, kp, *, ksize):
    N, cin, H, W = x_nchw.shape
    HW = H * W
    cexp, cinp = kp["w1"].shape
    cout = kp["wp"].shape[0]
    assert cexp % 8 == 0 and cinp % 8 == 0, "channel dims must be sublane aligned"
    assert _LANE_PAD >= (ksize // 2) * (W + 1)

    x_cf = x_nchw.reshape(N, cin, HW)                 # free reshape (NCHW-flat)
    if cinp != cin:
        x_cf = jnp.pad(x_cf, ((0, 0), (0, cinp - cin), (0, 0)))

    out = pl.pallas_call(
        partial(_fused_block_kernel, H=H, W=W, ksize=ksize),
        out_shape=jax.ShapeDtypeStruct((N, cout, HW), x_nchw.dtype),
        grid=(N,),
        in_specs=[
            pl.BlockSpec((1, cinp, HW), lambda n: (n, 0, 0)),
            pl.BlockSpec((cexp, cinp), lambda n: (0, 0)),
            pl.BlockSpec((cexp, 1), lambda n: (0, 0)),
            pl.BlockSpec((cexp, ksize * ksize), lambda n: (0, 0)),
            pl.BlockSpec((cexp, 1), lambda n: (0, 0)),
            pl.BlockSpec((cout, cexp + cinp), lambda n: (0, 0)),
            pl.BlockSpec((cout, 1), lambda n: (0, 0)),
        ],
        out_specs=pl.BlockSpec((1, cout, HW), lambda n: (n, 0, 0)),
        scratch_shapes=[pltpu.VMEM((cexp, 2 * _LANE_PAD + HW), jnp.float32)],
        compiler_params=pltpu.CompilerParams(dimension_semantics=("parallel",)),
    )(x_cf, kp["w1"], kp["b1"], kp["w2"], kp["b2"], kp["wp"], kp["bp"])
    return out.reshape(N, cout, H, W)


# --------------------------------------------------------------------------
# Parameters: torch-like raw params, then BN folding + packing for the kernel.
# --------------------------------------------------------------------------
def _fold_bn(gamma, beta, mean, var, eps=1e-5):
    s = gamma / jnp.sqrt(var + eps)
    return s, beta - mean * s


def make_raw_params(key, ksize, cin, cexp, cout):
    def bn(k, c):
        k1, k2, k3, k4 = jax.random.split(k, 4)
        return (1.0 + 0.1 * jax.random.normal(k1, (c,)),
                0.1 * jax.random.normal(k2, (c,)),
                0.1 * jax.random.normal(k3, (c,)),
                1.0 + 0.1 * jax.random.uniform(k4, (c,)))

    ks = jax.random.split(key, 8)
    return {
        "w1": 0.1 * jax.random.normal(ks[0], (cexp, cin), jnp.float32),
        "bn1": bn(ks[1], cexp),
        "w2": 0.1 * jax.random.normal(ks[2], (cexp, ksize, ksize), jnp.float32),
        "bn2": bn(ks[3], cexp),
        "w3": 0.1 * jax.random.normal(ks[4], (cout, cexp), jnp.float32),
        "bn3": bn(ks[5], cout),
        "wskip": 0.1 * jax.random.normal(ks[6], (cout, cin), jnp.float32),
        "bnskip": bn(ks[7], cout),
    }


def pack_params(raw, *, ksize, cin, cexp, cout):
    """Fold BN scales into weights and lay them out for the fused kernel."""
    cinp = ((cin + 7) // 8) * 8          # pad input channels to a sublane tile
    s1, b1 = _fold_bn(*raw["bn1"])
    s2, b2 = _fold_bn(*raw["bn2"])
    s3, b3 = _fold_bn(*raw["bn3"])
    ss, bs = _fold_bn(*raw["bnskip"])

    w1 = raw["w1"] * s1[:, None]                                  # (cexp, cin)
    w1 = jnp.pad(w1, ((0, 0), (0, cinp - cin)))                   # (cexp, cinp)
    w2 = raw["w2"].reshape(cexp, ksize * ksize) * s2[:, None]     # (cexp, k*k)
    w3 = raw["w3"] * s3[:, None]                                  # (cout, cexp)
    wsk = raw["wskip"] * ss[:, None]                              # (cout, cin)
    wsk = jnp.pad(wsk, ((0, 0), (0, cinp - cin)))                 # (cout, cinp)
    return {
        "w1": w1,
        "b1": b1[:, None],
        "w2": w2,
        "b2": b2[:, None],
        "wp": jnp.concatenate([w3, wsk], axis=1),                 # (cout, cexp+cinp)
        "bp": (b3 + bs)[:, None],
    }


# --------------------------------------------------------------------------
# Plain-JAX reference (uses the raw, unfolded params) for correctness check.
# --------------------------------------------------------------------------
def _bn_ref(x, bn, eps=1e-5):
    g, b, m, v = bn
    s = g / jnp.sqrt(v + eps)
    return x * s[None, :, None, None] + (b - m * s)[None, :, None, None]


def block_forward_ref(x, raw, *, ksize):
    cexp = raw["w1"].shape[0]
    h = jnp.einsum("nchw,ec->nehw", x, raw["w1"])
    h = jnp.maximum(_bn_ref(h, raw["bn1"]), 0.0)
    h = lax.conv_general_dilated(
        h, raw["w2"][:, None], window_strides=(1, 1),
        padding=[(ksize // 2, ksize // 2)] * 2,
        dimension_numbers=("NCHW", "OIHW", "NCHW"),
        feature_group_count=cexp)
    h = jnp.maximum(_bn_ref(h, raw["bn2"]), 0.0)
    out = _bn_ref(jnp.einsum("nehw,oe->nohw", h, raw["w3"]), raw["bn3"])
    skip = _bn_ref(jnp.einsum("nchw,oc->nohw", x, raw["wskip"]), raw["bnskip"])
    return out + skip


if __name__ == "__main__":
    KSIZE, CIN, CEXP, COUT = 3, 4, 16, 8
    N, H, W = 2, 16, 16

    key = jax.random.PRNGKey(0)
    kx, kparam = jax.random.split(key)
    x = jax.random.normal(kx, (N, CIN, H, W), jnp.float32)   # NCHW input
    raw = make_raw_params(kparam, KSIZE, CIN, CEXP, COUT)
    packed = pack_params(raw, ksize=KSIZE, cin=CIN, cexp=CEXP, cout=COUT)

    out = block_forward(x, packed, ksize=KSIZE)
    out = jax.block_until_ready(out)

    ref = block_forward_ref(x, raw, ksize=KSIZE)
    assert out.shape == (N, COUT, H, W)
    assert jnp.allclose(out, ref, atol=1e-4, rtol=1e-4), "mismatch vs JAX reference"

    print("KERNEL_OK")
</pallas_src>

<mosaic_0001>
module attributes {stable_mosaic.version = 11 : i64} {
  func.func @_fused_block_kernel(%arg0: i32, %arg1: memref<1x8x256xf32, #tpu.memory_space<vmem>>, %arg2: memref<16x8xf32, #tpu.memory_space<vmem>>, %arg3: memref<16x1xf32, #tpu.memory_space<vmem>>, %arg4: memref<16x9xf32, #tpu.memory_space<vmem>>, %arg5: memref<16x1xf32, #tpu.memory_space<vmem>>, %arg6: memref<8x24xf32, #tpu.memory_space<vmem>>, %arg7: memref<8x1xf32, #tpu.memory_space<vmem>>, %arg8: memref<1x8x256xf32, #tpu.memory_space<vmem>>, %arg9: memref<16x512xf32, #tpu.memory_space<vmem>>) attributes {dimension_semantics = [#tpu.dimension_semantics<parallel>], iteration_bounds = array<i64: 2>, scalar_prefetch = 0 : i64, scratch_operands = 1 : i64, tpu.core_type = #tpu.core_type<tc>, window_params = [{transform_indices = @transform_0, window_bounds = array<i64: 1, 8, 256>}, {pipeline_mode = #tpu.pipeline_mode<synchronous>, transform_indices = @transform_1, window_bounds = array<i64: 16, 8>}, {pipeline_mode = #tpu.pipeline_mode<synchronous>, transform_indices = @transform_2, window_bounds = array<i64: 16, 1>}, {pipeline_mode = #tpu.pipeline_mode<synchronous>, transform_indices = @transform_3, window_bounds = array<i64: 16, 9>}, {pipeline_mode = #tpu.pipeline_mode<synchronous>, transform_indices = @transform_4, window_bounds = array<i64: 16, 1>}, {pipeline_mode = #tpu.pipeline_mode<synchronous>, transform_indices = @transform_5, window_bounds = array<i64: 8, 24>}, {pipeline_mode = #tpu.pipeline_mode<synchronous>, transform_indices = @transform_6, window_bounds = array<i64: 8, 1>}, {transform_indices = @transform_7, window_bounds = array<i64: 1, 8, 256>}]} {
    %c0 = arith.constant 0 : index
    %c0_0 = arith.constant 0 : index
    %c0_1 = arith.constant 0 : index
    %0 = vector.load %arg1[%c0, %c0_0, %c0_1] : memref<1x8x256xf32, #tpu.memory_space<vmem>>, vector<1x8x256xf32>
    %1 = vector.shape_cast %0 : vector<1x8x256xf32> to vector<8x256xf32>
    %c0_2 = arith.constant 0 : index
    %c0_3 = arith.constant 0 : index
    %2 = vector.load %arg2[%c0_2, %c0_3] : memref<16x8xf32, #tpu.memory_space<vmem>>, vector<16x8xf32>
    %cst = arith.constant dense<0.000000e+00> : vector<16x256xf32>
    %3 = tpu.matmul %2, %1, %cst {dimension_numbers = #tpu.dot_dimension_numbers<[1], [0], [0], [1], [0, 0, 1, 1], [], []>} : vector<16x8xf32>, vector<8x256xf32>, vector<16x256xf32> -> vector<16x256xf32>
    %c0_4 = arith.constant 0 : index
    %c0_5 = arith.constant 0 : index
    %4 = vector.load %arg3[%c0_4, %c0_5] : memref<16x1xf32, #tpu.memory_space<vmem>>, vector<16x1xf32>
    %5 = vector.broadcast %4 : vector<16x1xf32> to vector<16x256xf32>
    %6 = arith.addf %3, %5 : vector<16x256xf32>
    %cst_6 = arith.constant 0.000000e+00 : f32
    %7 = vector.broadcast %cst_6 : f32 to vector<16x256xf32>
    %8 = arith.maximumf %6, %7 : vector<16x256xf32>
    %cst_7 = arith.constant 0.000000e+00 : f32
    %9 = vector.broadcast %cst_7 : f32 to vector<16x128xf32>
    %c0_8 = arith.constant 0 : index
    %c0_9 = arith.constant 0 : index
    %10 = vector.load %arg9[%c0_8, %c0_9] : memref<16x512xf32, #tpu.memory_space<vmem>>, vector<16x128xf32>
    tpu.vector_store %arg9[%c0_8, %c0_9], %9 {strides = array<i32>} : memref<16x512xf32, #tpu.memory_space<vmem>>, vector<16x128xf32>,
    %cst_10 = arith.constant 0.000000e+00 : f32
    %11 = vector.broadcast %cst_10 : f32 to vector<16x128xf32>
    %c0_11 = arith.constant 0 : index
    %c384 = arith.constant 384 : index
    %12 = vector.load %arg9[%c0_11, %c384] : memref<16x512xf32, #tpu.memory_space<vmem>>, vector<16x128xf32>
    tpu.vector_store %arg9[%c0_11, %c384], %11 {strides = array<i32>} : memref<16x512xf32, #tpu.memory_space<vmem>>, vector<16x128xf32>,
    %c0_12 = arith.constant 0 : index
    %c128 = arith.constant 128 : index
    %13 = vector.load %arg9[%c0_12, %c128] : memref<16x512xf32, #tpu.memory_space<vmem>>, vector<16x256xf32>
    tpu.vector_store %arg9[%c0_12, %c128], %8 {strides = array<i32>} : memref<16x512xf32, #tpu.memory_space<vmem>>, vector<16x256xf32>,
    %14 = tpu.iota {dimensions = array<i32: 1>} : vector<1x256xi32>
    %c16_i32 = arith.constant 16 : i32
    %c0_i32 = arith.constant 0 : i32
    %15 = arith.cmpi eq, %c16_i32, %c0_i32 : i32
    %c1_i32 = arith.constant 1 : i32
    %16 = arith.select %15, %c1_i32, %c16_i32 : i32
    %17 = vector.broadcast %16 : i32 to vector<1x256xi32>
    %18 = arith.remsi %14, %17 : vector<1x256xi32>
    %c0_i32_13 = arith.constant 0 : i32
    %19 = vector.broadcast %c0_i32_13 : i32 to vector<1x256xi32>
    %20 = arith.cmpi ne, %18, %19 : vector<1x256xi32>
    %c0_i32_14 = arith.constant 0 : i32
    %21 = vector.broadcast %c0_i32_14 : i32 to vector<1x256xi32>
    %22 = arith.cmpi slt, %18, %21 : vector<1x256xi32>
    %c0_i32_15 = arith.constant 0 : i32
    %23 = arith.cmpi slt, %16, %c0_i32_15 : i32
    %24 = vector.broadcast %23 : i1 to vector<1x256xi1>
    %25 = vector.broadcast %24 : vector<1x256xi1> to vector<1x256xi1>
    %26 = arith.xori %22, %25 : vector<1x256xi1>
    %27 = arith.andi %26, %20 : vector<1x256xi1>
    %28 = vector.broadcast %16 : i32 to vector<1x256xi32>
    %29 = arith.addi %18, %28 : vector<1x256xi32>
    %30 = arith.select %27, %29, %18 : vector<1x256xi1>, vector<1x256xi32>
    %cst_16 = arith.constant 0.000000e+00 : f32
    %31 = vector.broadcast %cst_16 : f32 to vector<16x256xf32>
    %c0_17 = arith.constant 0 : index
    %c111 = arith.constant 111 : index
    %32 = vector.load %arg9[%c0_17, %c111] : memref<16x512xf32, #tpu.memory_space<vmem>>, vector<16x256xf32>
    %c0_18 = arith.constant 0 : index
    %c0_19 = arith.constant 0 : index
    %33 = vector.load %arg4[%c0_18, %c0_19] : memref<16x9xf32, #tpu.memory_space<vmem>>, vector<16x1xf32>
    %34 = vector.broadcast %33 : vector<16x1xf32> to vector<16x256xf32>
    %35 = arith.mulf %34, %32 : vector<16x256xf32>
    %c1_i32_20 = arith.constant 1 : i32
    %36 = vector.broadcast %c1_i32_20 : i32 to vector<1x256xi32>
    %37 = arith.cmpi sge, %30, %36 : vector<1x256xi32>
    %cst_21 = arith.constant 0.000000e+00 : f32
    %38 = vector.shape_cast %37 : vector<1x256xi1> to vector<1x256xi1>
    %39 = vector.broadcast %38 : vector<1x256xi1> to vector<16x256xi1>
    %40 = vector.broadcast %cst_21 : f32 to vector<16x256xf32>
    %41 = arith.select %39, %35, %40 : vector<16x256xi1>, vector<16x256xf32>
    %42 = arith.addf %31, %41 : vector<16x256xf32>
    %c0_22 = arith.constant 0 : index
    %c112 = arith.constant 112 : index
    %43 = vector.load %arg9[%c0_22, %c112] : memref<16x512xf32, #tpu.memory_space<vmem>>, vector<16x256xf32>
    %c0_23 = arith.constant 0 : index
    %c1 = arith.constant 1 : index
    %44 = vector.load %arg4[%c0_23, %c1] : memref<16x9xf32, #tpu.memory_space<vmem>>, vector<16x1xf32>
    %45 = vector.broadcast %44 : vector<16x1xf32> to vector<16x256xf32>
    %46 = arith.mulf %45, %43 : vector<16x256xf32>
    %47 = arith.addf %42, %46 : vector<16x256xf32>
    %c0_24 = arith.constant 0 : index
    %c113 = arith.constant 113 : index
    %48 = vector.load %arg9[%c0_24, %c113] : memref<16x512xf32, #tpu.memory_space<vmem>>, vector<16x256xf32>
    %c0_25 = arith.constant 0 : index
    %c2 = arith.constant 2 : index
    %49 = vector.load %arg4[%c0_25, %c2] : memref<16x9xf32, #tpu.memory_space<vmem>>, vector<16x1xf32>
    %50 = vector.broadcast %49 : vector<16x1xf32> to vector<16x256xf32>
    %51 = arith.mulf %50, %48 : vector<16x256xf32>
    %c15_i32 = arith.constant 15 : i32
    %52 = vector.broadcast %c15_i32 : i32 to vector<1x256xi32>
    %53 = arith.cmpi slt, %30, %52 : vector<1x256xi32>
    %cst_26 = arith.constant 0.000000e+00 : f32
    %54 = vector.shape_cast %53 : vector<1x256xi1> to vector<1x256xi1>
    %55 = vector.broadcast %54 : vector<1x256xi1> to vector<16x256xi1>
    %56 = vector.broadcast %cst_26 : f32 to vector<16x256xf32>
    %57 = arith.select %55, %51, %56 : vector<16x256xi1>, vector<16x256xf32>
    %58 = arith.addf %47, %57 : vector<16x256xf32>
    %c0_27 = arith.constant 0 : index
    %c127 = arith.constant 127 : index
    %59 = vector.load %arg9[%c0_27, %c127] : memref<16x512xf32, #tpu.memory_space<vmem>>, vector<16x256xf32>
    %c0_28 = arith.constant 0 : index
    %c3 = arith.constant 3 : index
    %60 = vector.load %arg4[%c0_28, %c3] : memref<16x9xf32, #tpu.memory_space<vmem>>, vector<16x1xf32>
    %61 = vector.broadcast %60 : vector<16x1xf32> to vector<16x256xf32>
    %62 = arith.mulf %61, %59 : vector<16x256xf32>
    %c1_i32_29 = arith.constant 1 : i32
    %63 = vector.broadcast %c1_i32_29 : i32 to vector<1x256xi32>
    %64 = arith.cmpi sge, %30, %63 : vector<1x256xi32>
    %cst_30 = arith.constant 0.000000e+00 : f32
    %65 = vector.shape_cast %64 : vector<1x256xi1> to vector<1x256xi1>
    %66 = vector.broadcast %65 : vector<1x256xi1> to vector<16x256xi1>
    %67 = vector.broadcast %cst_30 : f32 to vector<16x256xf32>
    %68 = arith.select %66, %62, %67 : vector<16x256xi1>, vector<16x256xf32>
    %69 = arith.addf %58, %68 : vector<16x256xf32>
    %c0_31 = arith.constant 0 : index
    %c128_32 = arith.constant 128 : index
    %70 = vector.load %arg9[%c0_31, %c128_32] : memref<16x512xf32, #tpu.memory_space<vmem>>, vector<16x256xf32>
    %c0_33 = arith.constant 0 : index
    %c4 = arith.constant 4 : index
    %71 = vector.load %arg4[%c0_33, %c4] : memref<16x9xf32, #tpu.memory_space<vmem>>, vector<16x1xf32>
    %72 = vector.broadcast %71 : vector<16x1xf32> to vector<16x256xf32>
    %73 = arith.mulf %72, %70 : vector<16x256xf32>
    %74 = arith.addf %69, %73 : vector<16x256xf32>
    %c0_34 = arith.constant 0 : index
    %c129 = arith.constant 129 : index
    %75 = vector.load %arg9[%c0_34, %c129] : memref<16x512xf32, #tpu.memory_space<vmem>>, vector<16x256xf32>
    %c0_35 = arith.constant 0 : index
    %c5 = arith.constant 5 : index
    %76 = vector.load %arg4[%c0_35, %c5] : memref<16x9xf32, #tpu.memory_space<vmem>>, vector<16x1xf32>
    %77 = vector.broadcast %76 : vector<16x1xf32> to vector<16x256xf32>
    %78 = arith.mulf %77, %75 : vector<16x256xf32>
    %c15_i32_36 = arith.constant 15 : i32
    %79 = vector.broadcast %c15_i32_36 : i32 to vector<1x256xi32>
    %80 = arith.cmpi slt, %30, %79 : vector<1x256xi32>
    %cst_37 = arith.constant 0.000000e+00 : f32
    %81 = vector.shape_cast %80 : vector<1x256xi1> to vector<1x256xi1>
    %82 = vector.broadcast %81 : vector<1x256xi1> to vector<16x256xi1>
    %83 = vector.broadcast %cst_37 : f32 to vector<16x256xf32>
    %84 = arith.select %82, %78, %83 : vector<16x256xi1>, vector<16x256xf32>
    %85 = arith.addf %74, %84 : vector<16x256xf32>
    %c0_38 = arith.constant 0 : index
    %c143 = arith.constant 143 : index
    %86 = vector.load %arg9[%c0_38, %c143] : memref<16x512xf32, #tpu.memory_space<vmem>>, vector<16x256xf32>
    %c0_39 = arith.constant 0 : index
    %c6 = arith.constant 6 : index
    %87 = vector.load %arg4[%c0_39, %c6] : memref<16x9xf32, #tpu.memory_space<vmem>>, vector<16x1xf32>
    %88 = vector.broadcast %87 : vector<16x1xf32> to vector<16x256xf32>
    %89 = arith.mulf %88, %86 : vector<16x256xf32>
    %c1_i32_40 = arith.constant 1 : i32
    %90 = vector.broadcast %c1_i32_40 : i32 to vector<1x256xi32>
    %91 = arith.cmpi sge, %30, %90 : vector<1x256xi32>
    %cst_41 = arith.constant 0.000000e+00 : f32
    %92 = vector.shape_cast %91 : vector<1x256xi1> to vector<1x256xi1>
    %93 = vector.broadcast %92 : vector<1x256xi1> to vector<16x256xi1>
    %94 = vector.broadcast %cst_41 : f32 to vector<16x256xf32>
    %95 = arith.select %93, %89, %94 : vector<16x256xi1>, vector<16x256xf32>
    %96 = arith.addf %85, %95 : vector<16x256xf32>
    %c0_42 = arith.constant 0 : index
    %c144 = arith.constant 144 : index
    %97 = vector.load %arg9[%c0_42, %c144] : memref<16x512xf32, #tpu.memory_space<vmem>>, vector<16x256xf32>
    %c0_43 = arith.constant 0 : index
    %c7 = arith.constant 7 : index
    %98 = vector.load %arg4[%c0_43, %c7] : memref<16x9xf32, #tpu.memory_space<vmem>>, vector<16x1xf32>
    %99 = vector.broadcast %98 : vector<16x1xf32> to vector<16x256xf32>
    %100 = arith.mulf %99, %97 : vector<16x256xf32>
    %101 = arith.addf %96, %100 : vector<16x256xf32>
    %c0_44 = arith.constant 0 : index
    %c145 = arith.constant 145 : index
    %102 = vector.load %arg9[%c0_44, %c145] : memref<16x512xf32, #tpu.memory_space<vmem>>, vector<16x256xf32>
    %c0_45 = arith.constant 0 : index
    %c8 = arith.constant 8 : index
    %103 = vector.load %arg4[%c0_45, %c8] : memref<16x9xf32, #tpu.memory_space<vmem>>, vector<16x1xf32>
    %104 = vector.broadcast %103 : vector<16x1xf32> to vector<16x256xf32>
    %105 = arith.mulf %104, %102 : vector<16x256xf32>
    %c15_i32_46 = arith.constant 15 : i32
    %106 = vector.broadcast %c15_i32_46 : i32 to vector<1x256xi32>
    %107 = arith.cmpi slt, %30, %106 : vector<1x256xi32>
    %cst_47 = arith.constant 0.000000e+00 : f32
    %108 = vector.shape_cast %107 : vector<1x256xi1> to vector<1x256xi1>
    %109 = vector.broadcast %108 : vector<1x256xi1> to vector<16x256xi1>
    %110 = vector.broadcast %cst_47 : f32 to vector<16x256xf32>
    %111 = arith.select %109, %105, %110 : vector<16x256xi1>, vector<16x256xf32>
    %112 = arith.addf %101, %111 : vector<16x256xf32>
    %c0_48 = arith.constant 0 : index
    %c0_49 = arith.constant 0 : index
    %113 = vector.load %arg5[%c0_48, %c0_49] : memref<16x1xf32, #tpu.memory_space<vmem>>, vector<16x1xf32>
    %114 = vector.broadcast %113 : vector<16x1xf32> to vector<16x256xf32>
    %115 = arith.addf %112, %114 : vector<16x256xf32>
    %cst_50 = arith.constant 0.000000e+00 : f32
    %116 = vector.broadcast %cst_50 : f32 to vector<16x256xf32>
    %117 = arith.maximumf %115, %116 : vector<16x256xf32>
    %118 = tpu.concatenate %117, %1 in 0 : vector<16x256xf32>, vector<8x256xf32> -> vector<24x256xf32>
    %c0_51 = arith.constant 0 : index
    %c0_52 = arith.constant 0 : index
    %119 = vector.load %arg6[%c0_51, %c0_52] : memref<8x24xf32, #tpu.memory_space<vmem>>, vector<8x24xf32>
    %cst_53 = arith.constant dense<0.000000e+00> : vector<8x256xf32>
    %120 = tpu.matmul %119, %118, %cst_53 {dimension_numbers = #tpu.dot_dimension_numbers<[1], [0], [0], [1], [0, 0, 1, 1], [], []>} : vector<8x24xf32>, vector<24x256xf32>, vector<8x256xf32> -> vector<8x256xf32>
    %c0_54 = arith.constant 0 : index
    %c0_55 = arith.constant 0 : index
    %121 = vector.load %arg7[%c0_54, %c0_55] : memref<8x1xf32, #tpu.memory_space<vmem>>, vector<8x1xf32>
    %122 = vector.broadcast %121 : vector<8x1xf32> to vector<8x256xf32>
    %123 = arith.addf %120, %122 : vector<8x256xf32>
    %c0_56 = arith.constant 0 : index
    %c0_57 = arith.constant 0 : index
    %c0_58 = arith.constant 0 : index
    %124 = vector.load %arg8[%c0_56, %c0_57, %c0_58] : memref<1x8x256xf32, #tpu.memory_space<vmem>>, vector<1x8x256xf32>
    %125 = vector.shape_cast %124 : vector<1x8x256xf32> to vector<8x256xf32>
    %126 = vector.shape_cast %123 : vector<8x256xf32> to vector<1x8x256xf32>
    tpu.vector_store %arg8[%c0_56, %c0_57, %c0_58], %126 {strides = array<i32>} : memref<1x8x256xf32, #tpu.memory_space<vmem>>, vector<1x8x256xf32>,
    return
  }
  func.func @transform_0(%arg0: i32) -> (i32, i32, i32) {
    %c0_i32 = arith.constant 0 : i32
    %c0_i32_0 = arith.constant 0 : i32
    %c0_i32_1 = arith.constant 0 : i32
    return %arg0, %c0_i32, %c0_i32_0 : i32, i32, i32
  }
  func.func @transform_1(%arg0: i32) -> (i32, i32) {
    %c0_i32 = arith.constant 0 : i32
    %c0_i32_0 = arith.constant 0 : i32
    %c0_i32_1 = arith.constant 0 : i32
    return %c0_i32, %c0_i32_0 : i32, i32
  }
  func.func @transform_2(%arg0: i32) -> (i32, i32) {
    %c0_i32 = arith.constant 0 : i32
    %c0_i32_0 = arith.constant 0 : i32
    %c0_i32_1 = arith.constant 0 : i32
    return %c0_i32, %c0_i32_0 : i32, i32
  }
  func.func @transform_3(%arg0: i32) -> (i32, i32) {
    %c0_i32 = arith.constant 0 : i32
    %c0_i32_0 = arith.constant 0 : i32
    %c0_i32_1 = arith.constant 0 : i32
    return %c0_i32, %c0_i32_0 : i32, i32
  }
  func.func @transform_4(%arg0: i32) -> (i32, i32) {
    %c0_i32 = arith.constant 0 : i32
    %c0_i32_0 = arith.constant 0 : i32
    %c0_i32_1 = arith.constant 0 : i32
    return %c0_i32, %c0_i32_0 : i32, i32
  }
  func.func @transform_5(%arg0: i32) -> (i32, i32) {
    %c0_i32 = arith.constant 0 : i32
    %c0_i32_0 = arith.constant 0 : i32
    %c0_i32_1 = arith.constant 0 : i32
    return %c0_i32, %c0_i32_0 : i32, i32
  }
  func.func @transform_6(%arg0: i32) -> (i32, i32) {
    %c0_i32 = arith.constant 0 : i32
    %c0_i32_0 = arith.constant 0 : i32
    %c0_i32_1 = arith.constant 0 : i32
    return %c0_i32, %c0_i32_0 : i32, i32
  }
  func.func @transform_7(%arg0: i32) -> (i32, i32, i32) {
    %c0_i32 = arith.constant 0 : i32
    %c0_i32_0 = arith.constant 0 : i32
    %c0_i32_1 = arith.constant 0 : i32
    return %arg0, %c0_i32, %c0_i32_0 : i32, i32, i32
  }
}

</mosaic_0001>

<llo_original>
// kernel: tpu_custom_call.1
$region0: #{tpu_custom_call.1}
  #allocation0 [shape = 'u32[]', space=smem, size = 0x4, offset = 0x4, fixed_abs, tag = 'smem constant byte address 0x4 - core index']
  #allocation1 [shape = 'u32[72,128]{1,0:T(1,128)}', space=vmem, size = 0x9000, scoped, tag = 'internal scratch']
  #allocation2 [shape = 'f32[16,512]{1,0:T(8,128)}', space=vmem, size = 0x8000, scoped, tag = 'scratch operand']
  %s0 = inlined_call_operand.vmem [shape: f32[2,8,256], index: 0, kind: input, shape index: {}]
  %s1 = inlined_call_operand.vmem [shape: f32[16,8], index: 1, kind: input, shape index: {}]
  %s2 = inlined_call_operand.vmem [shape: f32[16,1], index: 2, kind: input, shape index: {}]
  %s3 = inlined_call_operand.vmem [shape: f32[16,9], index: 3, kind: input, shape index: {}]
  %s4 = inlined_call_operand.vmem [shape: f32[16,1], index: 4, kind: input, shape index: {}]
  %s5 = inlined_call_operand.vmem [shape: f32[8,24], index: 5, kind: input, shape index: {}]
  %s6 = inlined_call_operand.vmem [shape: f32[8,1], index: 6, kind: input, shape index: {}]
  %s7 = inlined_call_operand.hbm [shape: f32[2,8,256], index: 7, kind: output, shape index: {}]
  %s8 = sld [smem:[#allocation0]]
  $region61: #{tpu_custom_call.1} parent=0
    _
  %s10 = ssub.s32 1, %s8
  %s11 = scalar_select 0, %s10, %s8
  $region1: #{tpu_custom_call.1} parent=0
    #allocation3 [shape = 'u8[16384]{0}', space=vmem, size = 0x4000, scoped, tag = 'output window, operand 0']
    #allocation4 [shape = 's32[2]{0}', space=sflag, size = 0x8, scoped, tag = 'scoped memory for tpu_custom_call.1']
    %12 = vsyncpa [#allocation4], 0
    %s13 = scalar_lea.sflag [#allocation4], 1
    %14 = vsyncpa %s13, 0
    loop: start=0, step=1, limit=4
    $region2: #{tpu_custom_call.1} parent=1 // loop_pre_header
      _
    $region3: #{tpu_custom_call.1} parent=1 // loop_header
      %s16 = sphi 0, %s20
      %p17 = scmp.ge.s32.totalorder %s16, 4
      %s26 = sphi 0, %s28
      %s29 = sphi 0, %s26
      %s30 = sphi 0, %s29
      %s46 = sphi 0, %s30
      %s50 = sphi 0, %s50
      %s52 = sphi 0, %s50
      %s53 = sphi 0, %s52
      %s67 = sphi 0, %s53
      %s71 = sphi 0, %s71
      %s73 = sphi 0, %s71
      %s74 = sphi 0, %s73
      %s88 = sphi 0, %s74
      %s92 = sphi 0, %s92
      %s94 = sphi 0, %s92
      %s95 = sphi 0, %s94
      %s109 = sphi 0, %s95
      %s113 = sphi 0, %s113
      %s115 = sphi 0, %s113
      %s116 = sphi 0, %s115
      %s130 = sphi 0, %s116
      %s134 = sphi 0, %s134
      %s136 = sphi 0, %s134
      %s137 = sphi 0, %s136
      %s151 = sphi 0, %s137
      %s155 = sphi 0, %s155
      %s157 = sphi 0, %s155
      %s158 = sphi 0, %s157
      %s172 = sphi 0, %s158
      %s178 = sphi 0, %s180
      %s181 = sphi 0, %s178
      %s182 = sphi 0, %s181
      %s198 = sphi 0, %s182
    $region4: #{tpu_custom_call.1} parent=1 // loop_header_branch
      %19 = sbr.rel (%p17) target = $region8
    $region5: #{tpu_custom_call.1} parent=1 // loop_body
      %s21 = ssub.s32 %s16, 1
      %s22 = ssub.s32 %s16, 2
      %s23 = sadd.s32 %s16, 1
      %s24 = ssub.s32 %s16, %s23
      %p25 = scmp.eq.s32.totalorder %s24, 0
      %s27 = sadd.s32 %s26, 1
      %s28 = scalar_select %p25, %s26, %s27
      %p31 = pneg %p25
      %p32 = scmp.eq.s32.totalorder %s16, 1
      %p33 = por %p31, %p32
      %p34 = scmp.ne.s32.totalorder %s26, %s29
      %p35 = scmp.eq.s32.totalorder %s16, 0
      %p36 = por %p34, %p35
      %p37 = scmp.ne.s32.totalorder %s26, %s29
      %p38 = scmp.eq.s32.totalorder %s21, 1
      %p39 = por %p37, %p38
      %p40 = scmp.ne.s32.totalorder %s29, %s30
      %p41 = scmp.eq.s32.totalorder %s21, 0
      %p42 = por %p40, %p41
      %p43 = scmp.ne.s32.totalorder %s29, %s30
      %p44 = scmp.eq.s32.totalorder %s22, 1
      %p45 = por %p43, %p44
      %p47 = scmp.ne.s32.totalorder %s30, %s46
      %p48 = scmp.eq.s32.totalorder %s22, 0
      %p49 = por %p47, %p48
      %s51 = sadd.s32 %s50, 1
      %p54 = scmp.eq.s32.totalorder %s16, 1
      %p55 = scmp.ne.s32.totalorder %s50, %s52
      %p56 = scmp.eq.s32.totalorder %s16, 0
      %p57 = por %p55, %p56
      %p58 = scmp.ne.s32.totalorder %s50, %s52
      %p59 = scmp.eq.s32.totalorder %s21, 1
      %p60 = por %p58, %p59
      %p61 = scmp.ne.s32.totalorder %s52, %s53
      %p62 = scmp.eq.s32.totalorder %s21, 0
      %p63 = por %p61, %p62
      %p64 = scmp.ne.s32.totalorder %s52, %s53
      %p65 = scmp.eq.s32.totalorder %s22, 1
      %p66 = por %p64, %p65
      %p68 = scmp.ne.s32.totalorder %s53, %s67
      %p69 = scmp.eq.s32.totalorder %s22, 0
      %p70 = por %p68, %p69
      %s72 = sadd.s32 %s71, 1
      %p75 = scmp.eq.s32.totalorder %s16, 1
      %p76 = scmp.ne.s32.totalorder %s71, %s73
      %p77 = scmp.eq.s32.totalorder %s16, 0
      %p78 = por %p76, %p77
      %p79 = scmp.ne.s32.totalorder %s71, %s73
      %p80 = scmp.eq.s32.totalorder %s21, 1
      %p81 = por %p79, %p80
      %p82 = scmp.ne.s32.totalorder %s73, %s74
      %p83 = scmp.eq.s32.totalorder %s21, 0
      %p84 = por %p82, %p83
      %p85 = scmp.ne.s32.totalorder %s73, %s74
      %p86 = scmp.eq.s32.totalorder %s22, 1
      %p87 = por %p85, %p86
      %p89 = scmp.ne.s32.totalorder %s74, %s88
      %p90 = scmp.eq.s32.totalorder %s22, 0
      %p91 = por %p89, %p90
      %s93 = sadd.s32 %s92, 1
      %p96 = scmp.eq.s32.totalorder %s16, 1
      %p97 = scmp.ne.s32.totalorder %s92, %s94
      %p98 = scmp.eq.s32.totalorder %s16, 0
      %p99 = por %p97, %p98
      %p100 = scmp.ne.s32.totalorder %s92, %s94
      %p101 = scmp.eq.s32.totalorder %s21, 1
      %p102 = por %p100, %p101
      %p103 = scmp.ne.s32.totalorder %s94, %s95
      %p104 = scmp.eq.s32.totalorder %s21, 0
      %p105 = por %p103, %p104
      %p106 = scmp.ne.s32.totalorder %s94, %s95
      %p107 = scmp.eq.s32.totalorder %s22, 1
      %p108 = por %p106, %p107
      %p110 = scmp.ne.s32.totalorder %s95, %s109
      %p111 = scmp.eq.s32.totalorder %s22, 0
      %p112 = por %p110, %p111
      %s114 = sadd.s32 %s113, 1
      %p117 = scmp.eq.s32.totalorder %s16, 1
      %p118 = scmp.ne.s32.totalorder %s113, %s115
      %p119 = scmp.eq.s32.totalorder %s16, 0
      %p120 = por %p118, %p119
      %p121 = scmp.ne.s32.totalorder %s113, %s115
      %p122 = scmp.eq.s32.totalorder %s21, 1
      %p123 = por %p121, %p122
      %p124 = scmp.ne.s32.totalorder %s115, %s116
      %p125 = scmp.eq.s32.totalorder %s21, 0
      %p126 = por %p124, %p125
      %p127 = scmp.ne.s32.totalorder %s115, %s116
      %p128 = scmp.eq.s32.totalorder %s22, 1
      %p129 = por %p127, %p128
      %p131 = scmp.ne.s32.totalorder %s116, %s130
      %p132 = scmp.eq.s32.totalorder %s22, 0
      %p133 = por %p131, %p132
      %s135 = sadd.s32 %s134, 1
      %p138 = scmp.eq.s32.totalorder %s16, 1
      %p139 = scmp.ne.s32.totalorder %s134, %s136
      %p140 = scmp.eq.s32.totalorder %s16, 0
      %p141 = por %p139, %p140
      %p142 = scmp.ne.s32.totalorder %s134, %s136
      %p143 = scmp.eq.s32.totalorder %s21, 1
      %p144 = por %p142, %p143
      %p145 = scmp.ne.s32.totalorder %s136, %s137
      %p146 = scmp.eq.s32.totalorder %s21, 0
      %p147 = por %p145, %p146
      %p148 = scmp.ne.s32.totalorder %s136, %s137
      %p149 = scmp.eq.s32.totalorder %s22, 1
      %p150 = por %p148, %p149
      %p152 = scmp.ne.s32.totalorder %s137, %s151
      %p153 = scmp.eq.s32.totalorder %s22, 0
      %p154 = por %p152, %p153
      %s156 = sadd.s32 %s155, 1
      %p159 = scmp.eq.s32.totalorder %s16, 1
      %p160 = scmp.ne.s32.totalorder %s155, %s157
      %p161 = scmp.eq.s32.totalorder %s16, 0
      %p162 = por %p160, %p161
      %p163 = scmp.ne.s32.totalorder %s155, %s157
      %p164 = scmp.eq.s32.totalorder %s21, 1
      %p165 = por %p163, %p164
      %p166 = scmp.ne.s32.totalorder %s157, %s158
      %p167 = scmp.eq.s32.totalorder %s21, 0
      %p168 = por %p166, %p167
      %p169 = scmp.ne.s32.totalorder %s157, %s158
      %p170 = scmp.eq.s32.totalorder %s22, 1
      %p171 = por %p169, %p170
      %p173 = scmp.ne.s32.totalorder %s158, %s172
      %p174 = scmp.eq.s32.totalorder %s22, 0
      %p175 = por %p173, %p174
      %s176 = ssub.s32 %s16, %s23
      %p177 = scmp.eq.s32.totalorder %s176, 0
      %s179 = sadd.s32 %s178, 1
      %s180 = scalar_select %p177, %s178, %s179
      %p183 = pneg %p177
      %p184 = scmp.eq.s32.totalorder %s16, 1
      %p185 = por %p183, %p184
      %p186 = scmp.ne.s32.totalorder %s178, %s181
      %p187 = scmp.eq.s32.totalorder %s16, 0
      %p188 = por %p186, %p187
      %p189 = scmp.ne.s32.totalorder %s178, %s181
      %p190 = scmp.eq.s32.totalorder %s21, 1
      %p191 = por %p189, %p190
      %p192 = scmp.ne.s32.totalorder %s181, %s182
      %p193 = scmp.eq.s32.totalorder %s21, 0
      %p194 = por %p192, %p193
      %p195 = scmp.ne.s32.totalorder %s181, %s182
      %p196 = scmp.eq.s32.totalorder %s22, 1
      %p197 = por %p195, %p196
      %p199 = scmp.ne.s32.totalorder %s182, %s198
      %p200 = scmp.eq.s32.totalorder %s22, 0
      %p201 = por %p199, %p200
      %p202 = scmp.le.s32.totalorder 1, %s16
      %p203 = scmp.lt.s32.totalorder %s16, 3
      %p204 = pnand %p202, %p203
      %p205 = pneg %p204
      // Predicated region
      $region9: #{tpu_custom_call.1} parent=5 // pred_check
        _
      $region10: #{tpu_custom_call.1} parent=5 // pred_check_branch
        %207 = sbr.rel (%p204) target = $region12
      $region11: #{tpu_custom_call.1} parent=5 // pred_region
        %s208 = ssub.s32 %s16, 1
        // Predicated region
        $region13: #{tpu_custom_call.1} parent=11 // pred_check
          %p209 = pneg %p63
        $region14: #{tpu_custom_call.1} parent=11 // pred_check_branch
          %211 = sbr.rel (%p209) target = $region16
        $region15: #{tpu_custom_call.1} parent=11 // pred_region
          _
        $region16: #{tpu_custom_call.1} parent=11 // pred_fallthru
          _
        // Predicated region
        $region17: #{tpu_custom_call.1} parent=11 // pred_check
          %p212 = pneg %p84
        $region18: #{tpu_custom_call.1} parent=11 // pred_check_branch
          %214 = sbr.rel (%p212) target = $region20
        $region19: #{tpu_custom_call.1} parent=11 // pred_region
          _
        $region20: #{tpu_custom_call.1} parent=11 // pred_fallthru
          _
        // Predicated region
        $region21: #{tpu_custom_call.1} parent=11 // pred_check
          %p215 = pneg %p105
        $region22: #{tpu_custom_call.1} parent=11 // pred_check_branch
          %217 = sbr.rel (%p215) target = $region24
        $region23: #{tpu_custom_call.1} parent=11 // pred_region
          _
        $region24: #{tpu_custom_call.1} parent=11 // pred_fallthru
          _
        // Predicated region
        $region25: #{tpu_custom_call.1} parent=11 // pred_check
          %p218 = pneg %p126
        $region26: #{tpu_custom_call.1} parent=11 // pred_check_branch
          %220 = sbr.rel (%p218) target = $region28
        $region27: #{tpu_custom_call.1} parent=11 // pred_region
          _
        $region28: #{tpu_custom_call.1} parent=11 // pred_fallthru
          _
        // Predicated region
        $region29: #{tpu_custom_call.1} parent=11 // pred_check
          %p221 = pneg %p147
        $region30: #{tpu_custom_call.1} parent=11 // pred_check_branch
          %223 = sbr.rel (%p221) target = $region32
        $region31: #{tpu_custom_call.1} parent=11 // pred_region
          _
        $region32: #{tpu_custom_call.1} parent=11 // pred_fallthru
          _
        // Predicated region
        $region33: #{tpu_custom_call.1} parent=11 // pred_check
          %p224 = pneg %p168
        $region34: #{tpu_custom_call.1} parent=11 // pred_check_branch
          %226 = sbr.rel (%p224) target = $region36
        $region35: #{tpu_custom_call.1} parent=11 // pred_region
          _
        $region36: #{tpu_custom_call.1} parent=11 // pred_fallthru
          _
      $region12: #{tpu_custom_call.1} parent=5 // pred_fallthru
        _
      %p227 = scmp.lt.s32.totalorder %s16, 2
      // Predicated region
      $region37: #{tpu_custom_call.1} parent=5 // pred_check
        %p228 = pneg %p227
      $region38: #{tpu_custom_call.1} parent=5 // pred_check_branch
        %230 = sbr.rel (%p228) target = $region40
      $region39: #{tpu_custom_call.1} parent=5 // pred_region
        // Predicated region
        $region41: #{tpu_custom_call.1} parent=39 // pred_check
          %p231 = pneg %p36
        $region42: #{tpu_custom_call.1} parent=39 // pred_check_branch
          %233 = sbr.rel (%p231) target = $region44
        $region43: #{tpu_custom_call.1} parent=39 // pred_region
          %p234 = scmp.lt.s32.totalorder %s16, 1
          %s235 = scalar_select %p234, %s16, 1
          %s236 = smul.addr %s235, 2
          %s237 = smul.addr %s236, 8
          %s238 = scalar_lea.vmem %s0, %s237
        $region44: #{tpu_custom_call.1} parent=39 // pred_fallthru
          _
      $region40: #{tpu_custom_call.1} parent=5 // pred_fallthru
        _
      %p239 = scmp.le.s32.totalorder 1, %s16
      %p240 = scmp.lt.s32.totalorder %s16, 3
      %p241 = pnand %p239, %p240
      %p242 = pneg %p241
      // Predicated region
      $region45: #{tpu_custom_call.1} parent=5 // pred_check
        _
      $region46: #{tpu_custom_call.1} parent=5 // pred_check_branch
        %244 = sbr.rel (%p241) target = $region48
      $region47: #{tpu_custom_call.1} parent=5 // pred_region
        %s245 = ssub.s32 %s16, 1
        %p246 = scmp.lt.s32.totalorder %s21, 1
        %s247 = scalar_select %p246, %s21, 1
        %s248 = smul.addr %s247, 2
        %s249 = smul.addr %s248, 8
        %s250 = scalar_lea.vmem %s0, %s249
        %p251 = pneg %p42
        %p252 = pneg %p39
        %p253 = pneg %p63
        %p254 = pneg %p60
        %p255 = pneg %p84
        %p256 = pneg %p81
        %p257 = pneg %p105
        %p258 = pneg %p102
        %p259 = pneg %p126
        %p260 = pneg %p123
        %p261 = pneg %p147
        %p262 = pneg %p144
        %p263 = pneg %p168
        %p264 = pneg %p165
        %p265 = pneg %p194
        %p266 = pneg %p191
        %s267 = sand.u32 %s181, 1
        %s268 = scalar_lea.sflag [#allocation4], %s267
        %s269 = sand.u32 %s181, 1
        %s270 = smul.addr %s269, 16
        %s271 = scalar_lea.vmem [#allocation3], %s270
        %p272 = scmp.lt.s32.totalorder %s21, 1
        %s273 = scalar_select %p272, %s21, 1
        %s274 = smul.addr %s273, 2
        %s275 = smul.addr %s274, 8
        %s276 = scalar_lea.vmem %s0, %s275
        %v277 = vld [vmem:[%s276] sm:$0xff]
        %v278 = vld [vmem:[%s276 + $0x8] sm:$0xff]
        %v279 = vld [vmem:[%s1] sm:$0xff]
        %v280 = vld [vmem:[%s1 + $0x8] sm:$0xff]
        %v281 = vld [vmem:[%s2] sm:$0xff]
        %v282 = vld [vmem:[%s2 + $0x8] sm:$0xff]
        %284 = vset.pattern.permute.xlu0 0
        %285 = vperm.xlu0 %284, %v281
        %v286 = vpop.permute.xlu0 %285
        %289 = vset.pattern.permute.xlu0 0
        %290 = vperm.xlu0 %289, %v282
        %v291 = vpop.permute.xlu0 %290
        %vm293 = vcmask 64512
        %v295 = vsel %vm293, %v279, 0
        %v298 = vsel %vm293, %v280, 0
        %300 = vmatpush.msra.mxu0 0.0
        %301 = vmatpush.msra.mxu0 0.0
        %302 = vmatpush.msra.mxu0 0.0
        %303 = vmatpush.msra.mxu0 0.0
        %304 = vmatpush.msra.mxu0 0.0
        %305 = vmatpush.msra.mxu0 0.0
        %306 = vmatpush.msra.mxu0 0.0
        %307 = vmatpush.msra.mxu0 0.0
        %308 = vmatpush.msra.mxu0 0.0
        %309 = vmatpush.msra.mxu0 0.0
        %310 = vmatpush.msra.mxu0 0.0
        %311 = vmatpush.msra.mxu0 0.0
        %312 = vmatpush.msra.mxu0 0.0
        %313 = vmatpush.msra.mxu0 0.0
        %314 = vmatpush.msra.mxu0 0.0
        %315 = vmatpush.msra.mxu0 %v277
        %316 = vmatmul.f32.gmra.mxu0 %v295
        %v317 = vpop.f32.mrf.mxu0
        %v318 = vadd.f32 %v286, %v317
        %319 = vmatmul.f32.gmra.mxu0 %v298
        %v320 = vpop.f32.mrf.mxu0
        %v321 = vadd.f32 %v291, %v320
        %322 = vdwg.mxu0
        %323 = vmatpush.msra.mxu0 0.0
        %324 = vmatpush.msra.mxu0 0.0
        %325 = vmatpush.msra.mxu0 0.0
        %326 = vmatpush.msra.mxu0 0.0
        %327 = vmatpush.msra.mxu0 0.0
        %328 = vmatpush.msra.mxu0 0.0
        %329 = vmatpush.msra.mxu0 0.0
        %330 = vmatpush.msra.mxu0 0.0
        %331 = vmatpush.msra.mxu0 0.0
        %332 = vmatpush.msra.mxu0 0.0
        %333 = vmatpush.msra.mxu0 0.0
        %334 = vmatpush.msra.mxu0 0.0
        %335 = vmatpush.msra.mxu0 0.0
        %336 = vmatpush.msra.mxu0 0.0
        %337 = vmatpush.msra.mxu0 0.0
        %338 = vmatpush.msra.mxu0 %v278
        %339 = vmatmul.f32.gmra.mxu0 %v295
        %v340 = vpop.f32.mrf.mxu0
        %v341 = vadd.f32 %v286, %v340
        %342 = vmatmul.f32.gmra.mxu0 %v298
        %v343 = vpop.f32.mrf.mxu0
        %v344 = vadd.f32 %v291, %v343
        %345 = vdwg.mxu0
        %v346 = vmax.f32 %v318, 0.0
        %v347 = vmax.f32 %v341, 0.0
        %v348 = vmax.f32 %v321, 0.0
        %v349 = vmax.f32 %v344, 0.0
        %350 = vst [vmem:[#allocation2] sm:$0xff] 0.0
        %351 = vst [vmem:[#allocation2 + $0x20] sm:$0xff] 0.0
        %352 = vst [vmem:[#allocation2 + $0x18] sm:$0xff] 0.0
        %353 = vst [vmem:[#allocation2 + $0x38] sm:$0xff] 0.0
        %354 = vst [vmem:[#allocation2 + $0x8] sm:$0xff] %v346
        %355 = vst [vmem:[#allocation2 + $0x10] sm:$0xff] %v347
        %356 = vst [vmem:[#allocation2 + $0x28] sm:$0xff] %v348
        %357 = vst [vmem:[#allocation2 + $0x30] sm:$0xff] %v349
        %v358 = vlaneseq
        %v359 = vand.u32 %v358, 127
        %v360 = vadd.s32 %v359, 128
        %vm361 = vcmp.lt.s32.totalorder %v359, 0
        %v362 = vsub.s32 0, %v359
        %v363 = vsel %vm361, %v362, %v359
        %v364 = vshrl.u32 %v363, 4
        %v365 = vand.u32 %v363, 15
        %v366 = vsub.s32 0, %v365
        %v367 = vsel %vm361, %v366, %v365
        %vm368 = vcmp.lt.s32.totalorder %v360, 0
        %v369 = vsub.s32 0, %v360
        %v370 = vsel %vm368, %v369, %v360
        %v371 = vshrl.u32 %v370, 4
        %v372 = vand.u32 %v370, 15
        %v373 = vsub.s32 0, %v372
        %v374 = vsel %vm368, %v373, %v372
        %vm375 = vcmp.ne.s32.totalorder %v367, 0
        %vm376 = vcmp.ne.s32.totalorder %v374, 0
        %vm377 = vcmp.lt.s32.totalorder %v367, 0
        %vm378 = vcmp.lt.s32.totalorder %v374, 0
        %vm379 = vmand %vm377, %vm375
        %vm380 = vmand %vm378, %vm376
        %v381 = vadd.s32 %v367, 16
        %v382 = vadd.s32 %v374, 16
        %v383 = vsel %vm379, %v381, %v367
        %v384 = vsel %vm380, %v382, %v374
        %v385 = vld [vmem:[#allocation2] sm:$0xff]
        %v386 = vld [vmem:[#allocation2 + $0x8] sm:$0xff]
        %v387 = vld [vmem:[#allocation2 + $0x10] sm:$0xff]
        %v388 = vld [vmem:[#allocation2 + $0x20] sm:$0xff]
        %v389 = vld [vmem:[#allocation2 + $0x28] sm:$0xff]
        %v390 = vld [vmem:[#allocation2 + $0x30] sm:$0xff]
        %v391 = vld [vmem:[%s3] sm:$0xff]
        %v392 = vld [vmem:[%s3 + $0x8] sm:$0xff]
        %394 = vset.pattern.permute.xlu0 0
        %395 = vperm.xlu0 %394, %v391
        %v396 = vpop.permute.xlu0 %395
        %399 = vset.pattern.permute.xlu0 0
        %400 = vperm.xlu0 %399, %v392
        %v401 = vpop.permute.xlu0 %400
        %v403 = vmul.f32 %v396, %v385
        %v404 = vmul.f32 %v396, %v386
        %v405 = vmul.f32 %v396, %v387
        %v406 = vmul.f32 %v401, %v388
        %v407 = vmul.f32 %v401, %v389
        %v408 = vmul.f32 %v401, %v390
        %vm409 = vcmp.ge.s32.totalorder %v383, 1
        %vm410 = vcmp.ge.s32.totalorder %v384, 1
        %v411 = vsel %vm409, 1, 0
        %v412 = vsel %vm410, 1, 0
        %vm413 = vcmp.eq.s32.totalorder %v411, 1
        %vm414 = vcmp.eq.s32.totalorder %v412, 1
        %421 = vrot.lane.b32.xlu0 %v403, 17
        %v422 = vpop.permute.xlu0 %421
        %423 = vrot.lane.b32.xlu0 %v404, 17
        %v424 = vpop.permute.xlu0 %423
        %425 = vrot.lane.b32.xlu0 %v405, 17
        %v426 = vpop.permute.xlu0 %425
        %427 = vrot.lane.b32.xlu0 %v406, 17
        %v428 = vpop.permute.xlu0 %427
        %429 = vrot.lane.b32.xlu0 %v407, 17
        %v430 = vpop.permute.xlu0 %429
        %431 = vrot.lane.b32.xlu0 %v408, 17
        %v432 = vpop.permute.xlu0 %431
        %vm433 = vcmask 138240
        %v434 = vsel %vm433, %v422, %v424
        %v435 = vsel %vm433, %v424, %v426
        %v436 = vsel %vm433, %v428, %v430
        %v437 = vsel %vm433, %v430, %v432
        %v442 = vsel %vm413, %v434, 0.0
        %v443 = vsel %vm414, %v435, 0.0
        %v444 = vsel %vm413, %v436, 0.0
        %v445 = vsel %vm414, %v437, 0.0
        %v446 = vadd.f32 %v442, 0.0
        %v447 = vadd.f32 %v443, 0.0
        %v448 = vadd.f32 %v444, 0.0
        %v449 = vadd.f32 %v445, 0.0
        %450 = vset.pattern.permute.xlu0 1
        %451 = vperm.xlu0 %450, %v391
        %v452 = vpop.permute.xlu0 %451
        %454 = vset.pattern.permute.xlu0 1
        %455 = vperm.xlu0 %454, %v392
        %v456 = vpop.permute.xlu0 %455
        %v458 = vmul.f32 %v452, %v385
        %v459 = vmul.f32 %v452, %v386
        %v460 = vmul.f32 %v452, %v387
        %v461 = vmul.f32 %v456, %v388
        %v462 = vmul.f32 %v456, %v389
        %v463 = vmul.f32 %v456, %v390
        %470 = vrot.lane.b32.xlu0 %v458, 16
        %v471 = vpop.permute.xlu0 %470
        %472 = vrot.lane.b32.xlu0 %v459, 16
        %v473 = vpop.permute.xlu0 %472
        %474 = vrot.lane.b32.xlu0 %v460, 16
        %v475 = vpop.permute.xlu0 %474
        %476 = vrot.lane.b32.xlu0 %v461, 16
        %v477 = vpop.permute.xlu0 %476
        %478 = vrot.lane.b32.xlu0 %v462, 16
        %v479 = vpop.permute.xlu0 %478
        %480 = vrot.lane.b32.xlu0 %v463, 16
        %v481 = vpop.permute.xlu0 %480
        %vm482 = vcmask 130048
        %v483 = vsel %vm482, %v471, %v473
        %v484 = vsel %vm482, %v473, %v475
        %v485 = vsel %vm482, %v477, %v479
        %v486 = vsel %vm482, %v479, %v481
        %v491 = vadd.f32 %v446, %v483
        %v492 = vadd.f32 %v447, %v484
        %v493 = vadd.f32 %v448, %v485
        %v494 = vadd.f32 %v449, %v486
        %495 = vset.pattern.permute.xlu0 2
        %496 = vperm.xlu0 %495, %v391
        %v497 = vpop.permute.xlu0 %496
        %499 = vset.pattern.permute.xlu0 2
        %500 = vperm.xlu0 %499, %v392
        %v501 = vpop.permute.xlu0 %500
        %v503 = vmul.f32 %v497, %v385
        %v504 = vmul.f32 %v497, %v386
        %v505 = vmul.f32 %v497, %v387
        %v506 = vmul.f32 %v501, %v388
        %v507 = vmul.f32 %v501, %v389
        %v508 = vmul.f32 %v501, %v390
        %vm509 = vcmp.lt.s32.totalorder %v383, 15
        %vm510 = vcmp.lt.s32.totalorder %v384, 15
        %v511 = vsel %vm509, 1, 0
        %v512 = vsel %vm510, 1, 0
        %vm513 = vcmp.eq.s32.totalorder %v511, 1
        %vm514 = vcmp.eq.s32.totalorder %v512, 1
        %521 = vrot.lane.b32.xlu0 %v503, 15
        %v522 = vpop.permute.xlu0 %521
        %523 = vrot.lane.b32.xlu0 %v504, 15
        %v524 = vpop.permute.xlu0 %523
        %525 = vrot.lane.b32.xlu0 %v505, 15
        %v526 = vpop.permute.xlu0 %525
        %527 = vrot.lane.b32.xlu0 %v506, 15
        %v528 = vpop.permute.xlu0 %527
        %529 = vrot.lane.b32.xlu0 %v507, 15
        %v530 = vpop.permute.xlu0 %529
        %531 = vrot.lane.b32.xlu0 %v508, 15
        %v532 = vpop.permute.xlu0 %531
        %vm533 = vcmask 121856
        %v534 = vsel %vm533, %v522, %v524
        %v535 = vsel %vm533, %v524, %v526
        %v536 = vsel %vm533, %v528, %v530
        %v537 = vsel %vm533, %v530, %v532
        %v542 = vsel %vm513, %v534, 0.0
        %v543 = vsel %vm514, %v535, 0.0
        %v544 = vsel %vm513, %v536, 0.0
        %v545 = vsel %vm514, %v537, 0.0
        %v546 = vadd.f32 %v491, %v542
        %v547 = vadd.f32 %v492, %v543
        %v548 = vadd.f32 %v493, %v544
        %v549 = vadd.f32 %v494, %v545
        %550 = vset.pattern.permute.xlu0 3
        %551 = vperm.xlu0 %550, %v391
        %v552 = vpop.permute.xlu0 %551
        %554 = vset.pattern.permute.xlu0 3
        %555 = vperm.xlu0 %554, %v392
        %v556 = vpop.permute.xlu0 %555
        %v558 = vmul.f32 %v552, %v385
        %v559 = vmul.f32 %v552, %v386
        %v560 = vmul.f32 %v552, %v387
        %v561 = vmul.f32 %v556, %v388
        %v562 = vmul.f32 %v556, %v389
        %v563 = vmul.f32 %v556, %v390
        %570 = vrot.lane.b32.xlu0 %v558, 1
        %v571 = vpop.permute.xlu0 %570
        %572 = vrot.lane.b32.xlu0 %v559, 1
        %v573 = vpop.permute.xlu0 %572
        %574 = vrot.lane.b32.xlu0 %v560, 1
        %v575 = vpop.permute.xlu0 %574
        %576 = vrot.lane.b32.xlu0 %v561, 1
        %v577 = vpop.permute.xlu0 %576
        %578 = vrot.lane.b32.xlu0 %v562, 1
        %v579 = vpop.permute.xlu0 %578
        %580 = vrot.lane.b32.xlu0 %v563, 1
        %v581 = vpop.permute.xlu0 %580
        %vm582 = vcmask 7168
        %v583 = vsel %vm582, %v571, %v573
        %v584 = vsel %vm582, %v573, %v575
        %v585 = vsel %vm582, %v577, %v579
        %v586 = vsel %vm582, %v579, %v581
        %v591 = vsel %vm413, %v583, 0.0
        %v592 = vsel %vm414, %v584, 0.0
        %v593 = vsel %vm413, %v585, 0.0
        %v594 = vsel %vm414, %v586, 0.0
        %v595 = vadd.f32 %v546, %v591
        %v596 = vadd.f32 %v547, %v592
        %v597 = vadd.f32 %v548, %v593
        %v598 = vadd.f32 %v549, %v594
        %599 = vset.pattern.permute.xlu0 4
        %600 = vperm.xlu0 %599, %v391
        %v601 = vpop.permute.xlu0 %600
        %603 = vset.pattern.permute.xlu0 4
        %604 = vperm.xlu0 %603, %v392
        %v605 = vpop.permute.xlu0 %604
        %v607 = vmul.f32 %v601, %v386
        %v608 = vmul.f32 %v601, %v387
        %v609 = vmul.f32 %v605, %v389
        %v610 = vmul.f32 %v605, %v390
        %v611 = vadd.f32 %v595, %v607
        %v612 = vadd.f32 %v596, %v608
        %v613 = vadd.f32 %v597, %v609
        %v614 = vadd.f32 %v598, %v610
        %v615 = vld [vmem:[#allocation2 + $0x8] sm:$0xff]
        %v616 = vld [vmem:[#allocation2 + $0x10] sm:$0xff]
        %v617 = vld [vmem:[#allocation2 + $0x18] sm:$0xff]
        %v618 = vld [vmem:[#allocation2 + $0x28] sm:$0xff]
        %v619 = vld [vmem:[#allocation2 + $0x30] sm:$0xff]
        %v620 = vld [vmem:[#allocation2 + $0x38] sm:$0xff]
        %621 = vset.pattern.permute.xlu0 5
        %622 = vperm.xlu0 %621, %v391
        %v623 = vpop.permute.xlu0 %622
        %625 = vset.pattern.permute.xlu0 5
        %626 = vperm.xlu0 %625, %v392
        %v627 = vpop.permute.xlu0 %626
        %v629 = vmul.f32 %v623, %v615
        %v630 = vmul.f32 %v623, %v616
        %v631 = vmul.f32 %v623, %v617
        %v632 = vmul.f32 %v627, %v618
        %v633 = vmul.f32 %v627, %v619
        %v634 = vmul.f32 %v627, %v620
        %641 = vrot.lane.b32.xlu0 %v629, 127
        %v642 = vpop.permute.xlu0 %641
        %643 = vrot.lane.b32.xlu0 %v630, 127
        %v644 = vpop.permute.xlu0 %643
        %645 = vrot.lane.b32.xlu0 %v631, 127
        %v646 = vpop.permute.xlu0 %645
        %647 = vrot.lane.b32.xlu0 %v632, 127
        %v648 = vpop.permute.xlu0 %647
        %649 = vrot.lane.b32.xlu0 %v633, 127
        %v650 = vpop.permute.xlu0 %649
        %651 = vrot.lane.b32.xlu0 %v634, 127
        %v652 = vpop.permute.xlu0 %651
        %vm653 = vcmask 1039360
        %v654 = vsel %vm653, %v642, %v644
        %v655 = vsel %vm653, %v644, %v646
        %v656 = vsel %vm653, %v648, %v650
        %v657 = vsel %vm653, %v650, %v652
        %v662 = vsel %vm513, %v654, 0.0
        %v663 = vsel %vm514, %v655, 0.0
        %v664 = vsel %vm513, %v656, 0.0
        %v665 = vsel %vm514, %v657, 0.0
        %v666 = vadd.f32 %v611, %v662
        %v667 = vadd.f32 %v612, %v663
        %v668 = vadd.f32 %v613, %v664
        %v669 = vadd.f32 %v614, %v665
        %670 = vset.pattern.permute.xlu0 6
        %671 = vperm.xlu0 %670, %v391
        %v672 = vpop.permute.xlu0 %671
        %674 = vset.pattern.permute.xlu0 6
        %675 = vperm.xlu0 %674, %v392
        %v676 = vpop.permute.xlu0 %675
        %v678 = vmul.f32 %v672, %v615
        %v679 = vmul.f32 %v672, %v616
        %v680 = vmul.f32 %v672, %v617
        %v681 = vmul.f32 %v676, %v618
        %v682 = vmul.f32 %v676, %v619
        %v683 = vmul.f32 %v676, %v620
        %690 = vrot.lane.b32.xlu0 %v678, 113
        %v691 = vpop.permute.xlu0 %690
        %692 = vrot.lane.b32.xlu0 %v679, 113
        %v693 = vpop.permute.xlu0 %692
        %694 = vrot.lane.b32.xlu0 %v680, 113
        %v695 = vpop.permute.xlu0 %694
        %696 = vrot.lane.b32.xlu0 %v681, 113
        %v697 = vpop.permute.xlu0 %696
        %698 = vrot.lane.b32.xlu0 %v682, 113
        %v699 = vpop.permute.xlu0 %698
        %700 = vrot.lane.b32.xlu0 %v683, 113
        %v701 = vpop.permute.xlu0 %700
        %vm702 = vcmask 924672
        %v703 = vsel %vm702, %v691, %v693
        %v704 = vsel %vm702, %v693, %v695
        %v705 = vsel %vm702, %v697, %v699
        %v706 = vsel %vm702, %v699, %v701
        %v711 = vsel %vm413, %v703, 0.0
        %v712 = vsel %vm414, %v704, 0.0
        %v713 = vsel %vm413, %v705, 0.0
        %v714 = vsel %vm414, %v706, 0.0
        %v715 = vadd.f32 %v666, %v711
        %v716 = vadd.f32 %v667, %v712
        %v717 = vadd.f32 %v668, %v713
        %v718 = vadd.f32 %v669, %v714
        %719 = vset.pattern.permute.xlu0 7
        %720 = vperm.xlu0 %719, %v391
        %v721 = vpop.permute.xlu0 %720
        %723 = vset.pattern.permute.xlu0 7
        %724 = vperm.xlu0 %723, %v392
        %v725 = vpop.permute.xlu0 %724
        %v727 = vmul.f32 %v721, %v615
        %v728 = vmul.f32 %v721, %v616
        %v729 = vmul.f32 %v721, %v617
        %v730 = vmul.f32 %v725, %v618
        %v731 = vmul.f32 %v725, %v619
        %v732 = vmul.f32 %v725, %v620
        %739 = vrot.lane.b32.xlu0 %v727, 112
        %v740 = vpop.permute.xlu0 %739
        %741 = vrot.lane.b32.xlu0 %v728, 112
        %v742 = vpop.permute.xlu0 %741
        %743 = vrot.lane.b32.xlu0 %v729, 112
        %v744 = vpop.permute.xlu0 %743
        %745 = vrot.lane.b32.xlu0 %v730, 112
        %v746 = vpop.permute.xlu0 %745
        %747 = vrot.lane.b32.xlu0 %v731, 112
        %v748 = vpop.permute.xlu0 %747
        %749 = vrot.lane.b32.xlu0 %v732, 112
        %v750 = vpop.permute.xlu0 %749
        %vm751 = vcmask 916480
        %v752 = vsel %vm751, %v740, %v742
        %v753 = vsel %vm751, %v742, %v744
        %v754 = vsel %vm751, %v746, %v748
        %v755 = vsel %vm751, %v748, %v750
        %v760 = vadd.f32 %v715, %v752
        %v761 = vadd.f32 %v716, %v753
        %v762 = vadd.f32 %v717, %v754
        %v763 = vadd.f32 %v718, %v755
        %764 = vset.pattern.permute.xlu0 8
        %765 = vperm.xlu0 %764, %v391
        %v766 = vpop.permute.xlu0 %765
        %768 = vset.pattern.permute.xlu0 8
        %769 = vperm.xlu0 %768, %v392
        %v770 = vpop.permute.xlu0 %769
        %v772 = vmul.f32 %v766, %v615
        %v773 = vmul.f32 %v766, %v616
        %v774 = vmul.f32 %v766, %v617
        %v775 = vmul.f32 %v770, %v618
        %v776 = vmul.f32 %v770, %v619
        %v777 = vmul.f32 %v770, %v620
        %784 = vrot.lane.b32.xlu0 %v772, 111
        %v785 = vpop.permute.xlu0 %784
        %786 = vrot.lane.b32.xlu0 %v773, 111
        %v787 = vpop.permute.xlu0 %786
        %788 = vrot.lane.b32.xlu0 %v774, 111
        %v789 = vpop.permute.xlu0 %788
        %790 = vrot.lane.b32.xlu0 %v775, 111
        %v791 = vpop.permute.xlu0 %790
        %792 = vrot.lane.b32.xlu0 %v776, 111
        %v793 = vpop.permute.xlu0 %792
        %794 = vrot.lane.b32.xlu0 %v777, 111
        %v795 = vpop.permute.xlu0 %794
        %vm796 = vcmask 908288
        %v797 = vsel %vm796, %v785, %v787
        %v798 = vsel %vm796, %v787, %v789
        %v799 = vsel %vm796, %v791, %v793
        %v800 = vsel %vm796, %v793, %v795
        %v805 = vsel %vm513, %v797, 0.0
        %v806 = vsel %vm514, %v798, 0.0
        %v807 = vsel %vm513, %v799, 0.0
        %v808 = vsel %vm514, %v800, 0.0
        %v809 = vadd.f32 %v760, %v805
        %v810 = vadd.f32 %v761, %v806
        %v811 = vadd.f32 %v762, %v807
        %v812 = vadd.f32 %v763, %v808
        %v813 = vld [vmem:[%s4] sm:$0xff]
        %v814 = vld [vmem:[%s4 + $0x8] sm:$0xff]
        %816 = vset.pattern.permute.xlu0 0
        %817 = vperm.xlu0 %816, %v813
        %v818 = vpop.permute.xlu0 %817
        %821 = vset.pattern.permute.xlu0 0
        %822 = vperm.xlu0 %821, %v814
        %v823 = vpop.permute.xlu0 %822
        %v825 = vadd.f32 %v809, %v818
        %v826 = vadd.f32 %v810, %v818
        %v827 = vadd.f32 %v811, %v823
        %v828 = vadd.f32 %v812, %v823
        %v829 = vmax.f32 %v825, 0.0
        %v830 = vmax.f32 %v826, 0.0
        %v831 = vmax.f32 %v827, 0.0
        %v832 = vmax.f32 %v828, 0.0
        %v833 = vld [vmem:[%s5] sm:$0xff]
        %v834 = vld [vmem:[%s6] sm:$0xff]
        %836 = vset.pattern.permute.xlu0 0
        %837 = vperm.xlu0 %836, %v834
        %v838 = vpop.permute.xlu0 %837
        %vm840 = vcmask 195584
        %v842 = vsel %vm840, %v833, 0
        %844 = vmatpush.msra.mxu0 0.0
        %845 = vmatpush.msra.mxu0 0.0
        %846 = vmatpush.msra.mxu0 0.0
        %847 = vmatpush.msra.mxu0 0.0
        %848 = vmatpush.msra.mxu0 0.0
        %849 = vmatpush.msra.mxu0 0.0
        %850 = vmatpush.msra.mxu0 0.0
        %851 = vmatpush.msra.mxu0 0.0
        %852 = vmatpush.msra.mxu0 0.0
        %853 = vmatpush.msra.mxu0 0.0
        %854 = vmatpush.msra.mxu0 0.0
        %855 = vmatpush.msra.mxu0 0.0
        %856 = vmatpush.msra.mxu0 0.0
        %857 = vmatpush.msra.mxu0 %v277
        %858 = vmatpush.msra.mxu0 %v831
        %859 = vmatpush.msra.mxu0 %v829
        %860 = vmatmul.f32.gmra.mxu0 %v842
        %v861 = vpop.f32.mrf.mxu0
        %v862 = vadd.f32 %v838, %v861
        %863 = vdwg.mxu0
        %864 = vmatpush.msra.mxu0 0.0
        %865 = vmatpush.msra.mxu0 0.0
        %866 = vmatpush.msra.mxu0 0.0
        %867 = vmatpush.msra.mxu0 0.0
        %868 = vmatpush.msra.mxu0 0.0
        %869 = vmatpush.msra.mxu0 0.0
        %870 = vmatpush.msra.mxu0 0.0
        %871 = vmatpush.msra.mxu0 0.0
        %872 = vmatpush.msra.mxu0 0.0
        %873 = vmatpush.msra.mxu0 0.0
        %874 = vmatpush.msra.mxu0 0.0
        %875 = vmatpush.msra.mxu0 0.0
        %876 = vmatpush.msra.mxu0 0.0
        %877 = vmatpush.msra.mxu0 %v278
        %878 = vmatpush.msra.mxu0 %v832
        %879 = vmatpush.msra.mxu0 %v830
        %880 = vmatmul.f32.gmra.mxu0 %v842
        %v881 = vpop.f32.mrf.mxu0
        %v882 = vadd.f32 %v838, %v881
        %883 = vdwg.mxu0
        %884 = vst [vmem:[%s271] sm:$0xff] %v862
        %885 = vst [vmem:[%s271 + $0x8] sm:$0xff] %v882
        %s886 = sand.u32 %s181, 1
        %s887 = scalar_lea.sflag [#allocation4], %s886
        %s888 = sand.u32 %s181, 1
        %s889 = smul.addr %s888, 16
        %s890 = scalar_lea.vmem [#allocation3], %s889
        // Predicated region
        $region49: #{tpu_custom_call.1} parent=47 // pred_check
          %p891 = pneg %p191
        $region50: #{tpu_custom_call.1} parent=47 // pred_check_branch
          %893 = sbr.rel (%p891) target = $region52
        $region51: #{tpu_custom_call.1} parent=47 // pred_region
          %895 = vsyncadd %s887, 0
          %s896 = smul.addr %s21, 2
          %s897 = smul.addr %s896, 8
          %s898 = scalar_lea.hbm %s7, %s897
          %s900 = sshll.u32 %s890, 4
          %s901 = int_to_ptr.vmem [resolvable:$true] %s900
          %s902 = sshll.u32 %s898, 4
          %s903 = int_to_ptr.hbm [resolvable:$true] %s902
          %905 = dma.vmem_to_hbm [thread:$0]  %s901, 256, %s903, %s887
        $region52: #{tpu_custom_call.1} parent=47 // pred_fallthru
          _
      $region48: #{tpu_custom_call.1} parent=5 // pred_fallthru
        _
      %p906 = scmp.le.s32.totalorder 2, %s16
      // Predicated region
      $region53: #{tpu_custom_call.1} parent=5 // pred_check
        %p907 = pneg %p906
      $region54: #{tpu_custom_call.1} parent=5 // pred_check_branch
        %909 = sbr.rel (%p907) target = $region56
      $region55: #{tpu_custom_call.1} parent=5 // pred_region
        %s910 = ssub.s32 %s16, 2
        // Predicated region
        $region57: #{tpu_custom_call.1} parent=55 // pred_check
          %p911 = pneg %p197
        $region58: #{tpu_custom_call.1} parent=55 // pred_check_branch
          %913 = sbr.rel (%p911) target = $region60
        $region59: #{tpu_custom_call.1} parent=55 // pred_region
          %s914 = sand.u32 %s182, 1
          %s915 = scalar_lea.sflag [#allocation4], %s914
          %s916 = sand.u32 %s182, 1
          %s917 = smul.addr %s916, 16
          %s918 = scalar_lea.vmem [#allocation3], %s917
          %920 = dma.done %s915, 256
        $region60: #{tpu_custom_call.1} parent=55 // pred_fallthru
          _
      $region56: #{tpu_custom_call.1} parent=5 // pred_fallthru
        _
    $region6: #{tpu_custom_call.1} parent=1 // loop_footer
      %s20 = sadd.s32 1, %s16
    $region7: #{tpu_custom_call.1} parent=1 // loop_footer_branch
      %15 = sbr.rel target = $region3
    $region8: #{tpu_custom_call.1} parent=1 // loop_exit
      _
    %921 = vsyncpa [#allocation4], 1
    %s922 = scalar_lea.sflag [#allocation4], 1
    %923 = vsyncpa %s922, 1

</llo_original>
